<compile_context>
chip_gen: v5e
topology: v5e:2x2
jax: 0.10.0
libtpu: 0.0.40
codegen_flags: <defaults>
</compile_context>

<pallas_src>
import jax
import jax.numpy as jnp
from jax.experimental import pallas as pl
from jax.experimental.pallas import tpu as pltpu

INPUT_SIZE = 4
HIDDEN = 100          # logical hidden size (PyTorch)
NUM_CLASSES = 4

HP = 128              # hidden padded to a full lane group
CP = 128              # classes padded to a full lane group (lane-dense output store)
NG = 3                # kept gates after pruning f: [i, g, o]
GW = NG * HP          # packed gate width = 384

# Gate-slab row layout (all f32, GW lanes):
#   rows 0..INPUT_SIZE-1 : layer-1 input weights (packed, per-gate 128-lane groups)
#   row  L1_BIAS_ROW     : layer-1 bias (b_ih + b_hh, packed)
#   rows L2_W_ROW..+127  : layer-2 input weights (hidden rows padded 100->128)
#   row  L2_B_ROW        : layer-2 bias (packed)
L1_BIAS_ROW = INPUT_SIZE            # 4
L2_W_ROW = 8                        # sublane-aligned start of the 128-row w2 block
L2_B_ROW = L2_W_ROW + HP            # 136 (multiple of 8)
GATE_SLAB_ROWS = L2_B_ROW + 8       # 144

# FC-slab row layout (CP lanes): rows 0..127 = wfc (padded), row 128 = bias.
FC_BIAS_ROW = HP
FC_SLAB_ROWS = HP + 8               # 136


def _cell(gates):
    """gates: (B, 3*HP) in packed order [i, g, o]; previous cell state is zero."""
    i = jax.nn.sigmoid(gates[:, 0 * HP:1 * HP])
    g = jnp.tanh(gates[:, 1 * HP:2 * HP])
    o = jax.nn.sigmoid(gates[:, 2 * HP:3 * HP])
    return o * jnp.tanh(i * g)          # padded cols stay exactly 0 (zero-padded W/b)


def kamp_rnn_kernel(x_ref, gate_slab_ref, fc_slab_ref, out_ref):
    x = x_ref[...]                                            # (B, 4) f32
    B = x.shape[0]

    # ----- LSTM layer 1: K = 4 contraction on the VPU (4 unrolled broadcast FMAs) -----
    gates1 = jnp.broadcast_to(
        gate_slab_ref[L1_BIAS_ROW:L1_BIAS_ROW + 1, :], (B, GW))
    for k in range(INPUT_SIZE):
        gates1 = gates1 + x[:, k:k + 1] * gate_slab_ref[k:k + 1, :]
    h1 = _cell(gates1)                                        # (B, 128)

    # ----- LSTM layer 2: K = 128 contraction on the MXU -----
    w2 = gate_slab_ref[L2_W_ROW:L2_W_ROW + HP, :]             # (128, 384)
    b2 = gate_slab_ref[L2_B_ROW:L2_B_ROW + 1, :]              # (1, 384)
    gates2 = jnp.dot(h1, w2, preferred_element_type=jnp.float32) + b2
    h2 = _cell(gates2)                                        # (B, 128)

    # ----- Linear head (lane-dense (B, 128) store; sliced to (B, 4) in wrapper) -----
    wfc = fc_slab_ref[0:HP, :]                                # (128, 128)
    bfc = fc_slab_ref[FC_BIAS_ROW:FC_BIAS_ROW + 1, :]         # (1, 128)
    y = jnp.dot(h2, wfc, preferred_element_type=jnp.float32) + bfc
    out_ref[...] = y.astype(out_ref.dtype)                    # (B, 128)


def kamp_rnn_forward(x, packed_params):
    gate_slab, fc_slab = packed_params
    B = x.shape[0]
    vmem = pl.BlockSpec(memory_space=pltpu.MemorySpace.VMEM)
    # NOTE: gridless single block is right at these shapes (~290 KB of params, B tiny).
    # If B ever grows, add a batch grid with dimension_semantics=("parallel",) so v7x
    # can shard the batch across its two TensorCores.
    y_pad = pl.pallas_call(
        kamp_rnn_kernel,
        out_shape=jax.ShapeDtypeStruct((B, CP), jnp.float32),
        in_specs=[vmem, vmem, vmem],
        out_specs=vmem,
    )(x, gate_slab, fc_slab)
    return y_pad[:, :NUM_CLASSES]


# ----------------------------------------------------------------------------------
# Parameter construction / packing
# ----------------------------------------------------------------------------------
def init_torch_style_params(key):
    """PyTorch-layout params with U(-1/sqrt(H), 1/sqrt(H)) init (like nn.LSTM/Linear)."""
    k = 1.0 / jnp.sqrt(jnp.float32(HIDDEN))
    ks = jax.random.split(key, 10)

    def u(kk, shape):
        return jax.random.uniform(kk, shape, jnp.float32, minval=-k, maxval=k)

    w_ih1 = u(ks[0], (4 * HIDDEN, INPUT_SIZE))   # weight_ih_l0, gate rows [i, f, g, o]
    w_hh1 = u(ks[1], (4 * HIDDEN, HIDDEN))       # weight_hh_l0
    b_ih1 = u(ks[2], (4 * HIDDEN,))
    b_hh1 = u(ks[3], (4 * HIDDEN,))
    w_ih2 = u(ks[4], (4 * HIDDEN, HIDDEN))       # weight_ih_l1
    w_hh2 = u(ks[5], (4 * HIDDEN, HIDDEN))       # weight_hh_l1
    b_ih2 = u(ks[6], (4 * HIDDEN,))
    b_hh2 = u(ks[7], (4 * HIDDEN,))
    w_fc = u(ks[8], (NUM_CLASSES, HIDDEN))
    b_fc = u(ks[9], (NUM_CLASSES,))
    return (w_ih1, w_hh1, b_ih1, b_hh1, w_ih2, w_hh2, b_ih2, b_hh2, w_fc, b_fc)


def pack_params(torch_params):
    """PyTorch-layout params -> (gate_slab (144,384), fc_slab (136,128)) f32."""
    (w_ih1, _w_hh1, b_ih1, b_hh1,
     w_ih2, _w_hh2, b_ih2, b_hh2, w_fc, b_fc) = torch_params
    H = HIDDEN

    def pack_w(w):
        """(4H, K) in gate order [i, f, g, o] -> (K, 3*HP) [i, g, o], 128-lane per gate."""
        wi, wg, wo = w[0:H], w[2 * H:3 * H], w[3 * H:4 * H]      # forget gate pruned

        def pad_gate(g):                                         # (H, K) -> (K, HP)
            return jnp.pad(g.T, ((0, 0), (0, HP - H)))

        return jnp.concatenate([pad_gate(wi), pad_gate(wg), pad_gate(wo)], axis=1)

    def pack_b(b_ih, b_hh):
        """Fold b_ih + b_hh, prune f, pad each gate to 128 lanes -> (3*HP,)."""
        b = b_ih + b_hh
        bi, bg, bo = b[0:H], b[2 * H:3 * H], b[3 * H:4 * H]
        pad = lambda v: jnp.pad(v, (0, HP - H))
        return jnp.concatenate([pad(bi), pad(bg), pad(bo)])

    w1p = pack_w(w_ih1)                                          # (4, 384)
    b1p = pack_b(b_ih1, b_hh1)                                   # (384,)
    w2p = jnp.pad(pack_w(w_ih2), ((0, HP - H), (0, 0)))          # (128, 384)
    b2p = pack_b(b_ih2, b_hh2)                                   # (384,)

    gate_slab = jnp.zeros((GATE_SLAB_ROWS, GW), jnp.float32)
    gate_slab = gate_slab.at[0:INPUT_SIZE, :].set(w1p)
    gate_slab = gate_slab.at[L1_BIAS_ROW, :].set(b1p)
    gate_slab = gate_slab.at[L2_W_ROW:L2_W_ROW + HP, :].set(w2p)
    gate_slab = gate_slab.at[L2_B_ROW, :].set(b2p)

    wfc_p = jnp.pad(w_fc.T, ((0, HP - H), (0, CP - NUM_CLASSES)))  # (128, 128)
    fc_slab = jnp.zeros((FC_SLAB_ROWS, CP), jnp.float32)
    fc_slab = fc_slab.at[0:HP, :].set(wfc_p)
    fc_slab = fc_slab.at[FC_BIAS_ROW, 0:NUM_CLASSES].set(b_fc)

    return gate_slab, fc_slab


# ----------------------------------------------------------------------------------
# Pure-JAX reference: full PyTorch LSTM math from raw PyTorch-layout params
# (catches packing / transpose / gate-order mistakes, unlike a folded-param reference).
# ----------------------------------------------------------------------------------
def reference_forward(x, torch_params):
    (w_ih1, w_hh1, b_ih1, b_hh1,
     w_ih2, w_hh2, b_ih2, b_hh2, w_fc, b_fc) = torch_params
    H = HIDDEN
    B = x.shape[0]

    def lstm_cell(x_t, h_prev, c_prev, w_ih, w_hh, b_ih, b_hh):
        gates = x_t @ w_ih.T + h_prev @ w_hh.T + b_ih + b_hh
        i = jax.nn.sigmoid(gates[:, 0 * H:1 * H])
        f = jax.nn.sigmoid(gates[:, 1 * H:2 * H])
        g = jnp.tanh(gates[:, 2 * H:3 * H])
        o = jax.nn.sigmoid(gates[:, 3 * H:4 * H])
        c = f * c_prev + i * g
        h = o * jnp.tanh(c)
        return h, c

    h0 = jnp.zeros((B, H), jnp.float32)
    c0 = jnp.zeros((B, H), jnp.float32)
    h1, _ = lstm_cell(x, h0, c0, w_ih1, w_hh1, b_ih1, b_hh1)
    # inter-layer dropout: identity in eval mode
    h2, _ = lstm_cell(h1, h0, c0, w_ih2, w_hh2, b_ih2, b_hh2)
    return h2 @ w_fc.T + b_fc


if __name__ == "__main__":
    key = jax.random.PRNGKey(0)
    kp, kx = jax.random.split(key)
    torch_params = init_torch_style_params(kp)
    packed_params = pack_params(torch_params)

    B = 8
    x = jax.random.normal(kx, (B, INPUT_SIZE), jnp.float32)

    y = jax.jit(kamp_rnn_forward)(x, packed_params)
    y = jax.block_until_ready(y)

    y_ref = reference_forward(x, torch_params)
    assert y.shape == (B, NUM_CLASSES)
    assert jnp.allclose(y, y_ref, atol=1e-5, rtol=1e-5), "mismatch vs reference"

    print("KERNEL_OK")
</pallas_src>

<mosaic_0001>
module attributes {stable_mosaic.version = 11 : i64} {
  func.func @kamp_rnn_kernel(%arg0: memref<8x4xf32, #tpu.memory_space<vmem>>, %arg1: memref<144x384xf32, #tpu.memory_space<vmem>>, %arg2: memref<136x128xf32, #tpu.memory_space<vmem>>, %arg3: memref<8x128xf32, #tpu.memory_space<vmem>>) attributes {dimension_semantics = [], scalar_prefetch = 0 : i64, scratch_operands = 0 : i64, tpu.core_type = #tpu.core_type<tc>} {
    %c0 = arith.constant 0 : index
    %c0_0 = arith.constant 0 : index
    %0 = vector.load %arg0[%c0, %c0_0] : memref<8x4xf32, #tpu.memory_space<vmem>>, vector<8x4xf32>
    %c4 = arith.constant 4 : index
    %c0_1 = arith.constant 0 : index
    %1 = vector.load %arg1[%c4, %c0_1] : memref<144x384xf32, #tpu.memory_space<vmem>>, vector<1x384xf32>
    %2 = vector.shape_cast %1 : vector<1x384xf32> to vector<1x384xf32>
    %3 = vector.broadcast %2 : vector<1x384xf32> to vector<8x384xf32>
    %4 = vector.extract_strided_slice %0 {offsets = [0, 0], sizes = [8, 1], strides = [1, 1]} : vector<8x4xf32> to vector<8x1xf32>
    %c0_2 = arith.constant 0 : index
    %c0_3 = arith.constant 0 : index
    %5 = vector.load %arg1[%c0_2, %c0_3] : memref<144x384xf32, #tpu.memory_space<vmem>>, vector<1x384xf32>
    %6 = vector.broadcast %4 : vector<8x1xf32> to vector<8x384xf32>
    %7 = vector.broadcast %5 : vector<1x384xf32> to vector<8x384xf32>
    %8 = arith.mulf %6, %7 : vector<8x384xf32>
    %9 = arith.addf %3, %8 : vector<8x384xf32>
    %10 = vector.extract_strided_slice %0 {offsets = [0, 1], sizes = [8, 1], strides = [1, 1]} : vector<8x4xf32> to vector<8x1xf32>
    %c1 = arith.constant 1 : index
    %c0_4 = arith.constant 0 : index
    %11 = vector.load %arg1[%c1, %c0_4] : memref<144x384xf32, #tpu.memory_space<vmem>>, vector<1x384xf32>
    %12 = vector.broadcast %10 : vector<8x1xf32> to vector<8x384xf32>
    %13 = vector.broadcast %11 : vector<1x384xf32> to vector<8x384xf32>
    %14 = arith.mulf %12, %13 : vector<8x384xf32>
    %15 = arith.addf %9, %14 : vector<8x384xf32>
    %16 = vector.extract_strided_slice %0 {offsets = [0, 2], sizes = [8, 1], strides = [1, 1]} : vector<8x4xf32> to vector<8x1xf32>
    %c2 = arith.constant 2 : index
    %c0_5 = arith.constant 0 : index
    %17 = vector.load %arg1[%c2, %c0_5] : memref<144x384xf32, #tpu.memory_space<vmem>>, vector<1x384xf32>
    %18 = vector.broadcast %16 : vector<8x1xf32> to vector<8x384xf32>
    %19 = vector.broadcast %17 : vector<1x384xf32> to vector<8x384xf32>
    %20 = arith.mulf %18, %19 : vector<8x384xf32>
    %21 = arith.addf %15, %20 : vector<8x384xf32>
    %22 = vector.extract_strided_slice %0 {offsets = [0, 3], sizes = [8, 1], strides = [1, 1]} : vector<8x4xf32> to vector<8x1xf32>
    %c3 = arith.constant 3 : index
    %c0_6 = arith.constant 0 : index
    %23 = vector.load %arg1[%c3, %c0_6] : memref<144x384xf32, #tpu.memory_space<vmem>>, vector<1x384xf32>
    %24 = vector.broadcast %22 : vector<8x1xf32> to vector<8x384xf32>
    %25 = vector.broadcast %23 : vector<1x384xf32> to vector<8x384xf32>
    %26 = arith.mulf %24, %25 : vector<8x384xf32>
    %27 = arith.addf %21, %26 : vector<8x384xf32>
    %28 = vector.extract_strided_slice %27 {offsets = [0, 0], sizes = [8, 128], strides = [1, 1]} : vector<8x384xf32> to vector<8x128xf32>
    %29 = arith.negf %28 : vector<8x128xf32>
    %30 = math.exp %29 : vector<8x128xf32>
    %cst = arith.constant 1.000000e+00 : f32
    %31 = vector.broadcast %cst : f32 to vector<8x128xf32>
    %32 = arith.addf %31, %30 : vector<8x128xf32>
    %33 = arith.divf %31, %32 : vector<8x128xf32>
    %34 = vector.extract_strided_slice %27 {offsets = [0, 128], sizes = [8, 128], strides = [1, 1]} : vector<8x384xf32> to vector<8x128xf32>
    %35 = math.tanh %34 : vector<8x128xf32>
    %36 = vector.extract_strided_slice %27 {offsets = [0, 256], sizes = [8, 128], strides = [1, 1]} : vector<8x384xf32> to vector<8x128xf32>
    %37 = arith.negf %36 : vector<8x128xf32>
    %38 = math.exp %37 : vector<8x128xf32>
    %cst_7 = arith.constant 1.000000e+00 : f32
    %39 = vector.broadcast %cst_7 : f32 to vector<8x128xf32>
    %40 = arith.addf %39, %38 : vector<8x128xf32>
    %41 = arith.divf %39, %40 : vector<8x128xf32>
    %42 = arith.mulf %33, %35 : vector<8x128xf32>
    %43 = math.tanh %42 : vector<8x128xf32>
    %44 = arith.mulf %41, %43 : vector<8x128xf32>
    %c8 = arith.constant 8 : index
    %c0_8 = arith.constant 0 : index
    %45 = vector.load %arg1[%c8, %c0_8] : memref<144x384xf32, #tpu.memory_space<vmem>>, vector<128x384xf32>
    %c136 = arith.constant 136 : index
    %c0_9 = arith.constant 0 : index
    %46 = vector.load %arg1[%c136, %c0_9] : memref<144x384xf32, #tpu.memory_space<vmem>>, vector<1x384xf32>
    %cst_10 = arith.constant dense<0.000000e+00> : vector<8x384xf32>
    %47 = tpu.matmul %44, %45, %cst_10 {dimension_numbers = #tpu.dot_dimension_numbers<[1], [0], [0], [1], [0, 0, 1, 1], [], []>} : vector<8x128xf32>, vector<128x384xf32>, vector<8x384xf32> -> vector<8x384xf32>
    %48 = vector.broadcast %46 : vector<1x384xf32> to vector<8x384xf32>
    %49 = arith.addf %47, %48 : vector<8x384xf32>
    %50 = vector.extract_strided_slice %49 {offsets = [0, 0], sizes = [8, 128], strides = [1, 1]} : vector<8x384xf32> to vector<8x128xf32>
    %51 = arith.negf %50 : vector<8x128xf32>
    %52 = math.exp %51 : vector<8x128xf32>
    %cst_11 = arith.constant 1.000000e+00 : f32
    %53 = vector.broadcast %cst_11 : f32 to vector<8x128xf32>
    %54 = arith.addf %53, %52 : vector<8x128xf32>
    %55 = arith.divf %53, %54 : vector<8x128xf32>
    %56 = vector.extract_strided_slice %49 {offsets = [0, 128], sizes = [8, 128], strides = [1, 1]} : vector<8x384xf32> to vector<8x128xf32>
    %57 = math.tanh %56 : vector<8x128xf32>
    %58 = vector.extract_strided_slice %49 {offsets = [0, 256], sizes = [8, 128], strides = [1, 1]} : vector<8x384xf32> to vector<8x128xf32>
    %59 = arith.negf %58 : vector<8x128xf32>
    %60 = math.exp %59 : vector<8x128xf32>
    %cst_12 = arith.constant 1.000000e+00 : f32
    %61 = vector.broadcast %cst_12 : f32 to vector<8x128xf32>
    %62 = arith.addf %61, %60 : vector<8x128xf32>
    %63 = arith.divf %61, %62 : vector<8x128xf32>
    %64 = arith.mulf %55, %57 : vector<8x128xf32>
    %65 = math.tanh %64 : vector<8x128xf32>
    %66 = arith.mulf %63, %65 : vector<8x128xf32>
    %c0_13 = arith.constant 0 : index
    %c0_14 = arith.constant 0 : index
    %67 = vector.load %arg2[%c0_13, %c0_14] : memref<136x128xf32, #tpu.memory_space<vmem>>, vector<128x128xf32>
    %c128 = arith.constant 128 : index
    %c0_15 = arith.constant 0 : index
    %68 = vector.load %arg2[%c128, %c0_15] : memref<136x128xf32, #tpu.memory_space<vmem>>, vector<1x128xf32>
    %cst_16 = arith.constant dense<0.000000e+00> : vector<8x128xf32>
    %69 = tpu.matmul %66, %67, %cst_16 {dimension_numbers = #tpu.dot_dimension_numbers<[1], [0], [0], [1], [0, 0, 1, 1], [], []>} : vector<8x128xf32>, vector<128x128xf32>, vector<8x128xf32> -> vector<8x128xf32>
    %70 = vector.broadcast %68 : vector<1x128xf32> to vector<8x128xf32>
    %71 = arith.addf %69, %70 : vector<8x128xf32>
    %c0_17 = arith.constant 0 : index
    %c0_18 = arith.constant 0 : index
    %72 = vector.load %arg3[%c0_17, %c0_18] : memref<8x128xf32, #tpu.memory_space<vmem>>, vector<8x128xf32>
    tpu.vector_store %arg3[%c0_17, %c0_18], %71 {strides = array<i32>} : memref<8x128xf32, #tpu.memory_space<vmem>>, vector<8x128xf32>,
    return
  }
}

</mosaic_0001>

<llo_original>
// kernel: kamp_rnn_forward.1
$region0: #{kamp_rnn_forward.1}
  #allocation0 [shape = 'u32[]', space=smem, size = 0x4, offset = 0x4, fixed_abs, tag = 'smem constant byte address 0x4 - core index']
  #allocation1 [shape = 'u32[72,128]{1,0:T(1,128)}', space=vmem, size = 0x9000, scoped, tag = 'internal scratch']
  %s0 = inlined_call_operand.vmem [shape: f32[8,4], index: 0, kind: input, shape index: {}]
  %s1 = inlined_call_operand.hbm [shape: f32[144,384], index: 1, kind: input, shape index: {}]
  %s2 = inlined_call_operand.hbm [shape: f32[136,128], index: 2, kind: input, shape index: {}]
  %s3 = inlined_call_operand.vmem [shape: f32[8,128], index: 3, kind: output, shape index: {}]
  %s4 = sld [smem:[#allocation0]]
  $region30: #{kamp_rnn_forward.1} parent=0
    _
  %s6 = ssub.s32 1, %s4
  %s7 = scalar_select 0, %s6, %s4
  $region1: #{kamp_rnn_forward.1} parent=0
    #allocation2 [shape = 'u8[221184]{0}', space=vmem, size = 0x36000, scoped, tag = 'input window, operand 1, single buffered']
    #allocation3 [shape = 's32[1]{0}', space=sflag, size = 0x4, scoped, tag = 'scoped memory for kamp_rnn_forward.1']
    #allocation4 [shape = 'u8[69632]{0}', space=vmem, size = 0x11000, scoped, tag = 'input window, operand 2, single buffered']
    #allocation5 [shape = 's32[1]{0}', space=sflag, size = 0x4, scoped, tag = 'scoped memory for kamp_rnn_forward.1']
    %8 = vsyncpa [#allocation3], 0
    %9 = vsyncpa [#allocation5], 0
    // Predicated region
    $region2: #{kamp_rnn_forward.1} parent=1 // pred_check
      _
    $region3: #{kamp_rnn_forward.1} parent=1 // pred_check_branch
      %11 = sbr.rel (0) target = $region5
    $region4: #{kamp_rnn_forward.1} parent=1 // pred_region
      _
    $region5: #{kamp_rnn_forward.1} parent=1 // pred_fallthru
      _
    // Predicated region
    $region6: #{kamp_rnn_forward.1} parent=1 // pred_check
      _
    $region7: #{kamp_rnn_forward.1} parent=1 // pred_check_branch
      %13 = sbr.rel (0) target = $region9
    $region8: #{kamp_rnn_forward.1} parent=1 // pred_region
      %15 = vsyncadd [#allocation3], 0
      %s16 = sshll.u32 %s1, 4
      %s17 = int_to_ptr.hbm [resolvable:$true] %s16
      %s18 = sshll.u32 [#allocation2], 4
      %s19 = int_to_ptr.vmem [resolvable:$true] %s18
      %24 = dma.hbm_to_vmem [thread:$0]  %s17, 6912, %s19, [#allocation3], 384, 384, 24
    $region9: #{kamp_rnn_forward.1} parent=1 // pred_fallthru
      _
    // Predicated region
    $region10: #{kamp_rnn_forward.1} parent=1 // pred_check
      _
    $region11: #{kamp_rnn_forward.1} parent=1 // pred_check_branch
      %26 = sbr.rel (0) target = $region13
    $region12: #{kamp_rnn_forward.1} parent=1 // pred_region
      %28 = vsyncadd [#allocation5], 0
      %s29 = sshll.u32 %s2, 4
      %s30 = int_to_ptr.hbm [resolvable:$true] %s29
      %s31 = sshll.u32 [#allocation4], 4
      %s32 = int_to_ptr.vmem [resolvable:$true] %s31
      %37 = dma.hbm_to_vmem [thread:$0]  %s30, 2176, %s32, [#allocation5], 128, 128, 8
    $region13: #{kamp_rnn_forward.1} parent=1 // pred_fallthru
      _
    // Predicated region
    $region14: #{kamp_rnn_forward.1} parent=1 // pred_check
      _
    $region15: #{kamp_rnn_forward.1} parent=1 // pred_check_branch
      %39 = sbr.rel (0) target = $region17
    $region16: #{kamp_rnn_forward.1} parent=1 // pred_region
      %41 = dma.done [#allocation3], 6912
    $region17: #{kamp_rnn_forward.1} parent=1 // pred_fallthru
      _
    // Predicated region
    $region18: #{kamp_rnn_forward.1} parent=1 // pred_check
      _
    $region19: #{kamp_rnn_forward.1} parent=1 // pred_check_branch
      %43 = sbr.rel (0) target = $region21
    $region20: #{kamp_rnn_forward.1} parent=1 // pred_region
      %45 = dma.done [#allocation5], 2176
    $region21: #{kamp_rnn_forward.1} parent=1 // pred_fallthru
      _
    %v46 = vld [vmem:[%s0] sm:$0xff]
    %s47 = scalar_lea.vmem [#allocation2], 4
    %v48 = vld [vmem:[%s47] ss:$8 sm:$0x7]
    %v50 = vperm.slane %v48, 0
    %v51 = vperm.slane %v48, 1
    %v52 = vperm.slane %v48, 2
    %v56 = vld [vmem:[#allocation2] ss:$8 sm:$0x7]
    %58 = vset.pattern.permute.xlu0 0
    %59 = vperm.xlu0 %58, %v46
    %v60 = vpop.permute.xlu0 %59
    %v63 = vperm.slane %v56, 0
    %v64 = vperm.slane %v56, 1
    %v65 = vperm.slane %v56, 2
    %v69 = vmul.f32 %v60, %v63
    %v70 = vmul.f32 %v60, %v64
    %v71 = vmul.f32 %v60, %v65
    %v72 = vadd.f32 %v50, %v69
    %v73 = vadd.f32 %v51, %v70
    %v74 = vadd.f32 %v52, %v71
    %s75 = scalar_lea.vmem [#allocation2], 1
    %v76 = vld [vmem:[%s75] ss:$8 sm:$0x7]
    %77 = vset.pattern.permute.xlu0 1
    %78 = vperm.xlu0 %77, %v46
    %v79 = vpop.permute.xlu0 %78
    %v82 = vperm.slane %v76, 0
    %v83 = vperm.slane %v76, 1
    %v84 = vperm.slane %v76, 2
    %v88 = vmul.f32 %v79, %v82
    %v89 = vmul.f32 %v79, %v83
    %v90 = vmul.f32 %v79, %v84
    %v91 = vadd.f32 %v72, %v88
    %v92 = vadd.f32 %v73, %v89
    %v93 = vadd.f32 %v74, %v90
    %s94 = scalar_lea.vmem [#allocation2], 2
    %v95 = vld [vmem:[%s94] ss:$8 sm:$0x7]
    %96 = vset.pattern.permute.xlu0 2
    %97 = vperm.xlu0 %96, %v46
    %v98 = vpop.permute.xlu0 %97
    %v101 = vperm.slane %v95, 0
    %v102 = vperm.slane %v95, 1
    %v103 = vperm.slane %v95, 2
    %v107 = vmul.f32 %v98, %v101
    %v108 = vmul.f32 %v98, %v102
    %v109 = vmul.f32 %v98, %v103
    %v110 = vadd.f32 %v91, %v107
    %v111 = vadd.f32 %v92, %v108
    %v112 = vadd.f32 %v93, %v109
    %s113 = scalar_lea.vmem [#allocation2], 3
    %v114 = vld [vmem:[%s113] ss:$8 sm:$0x7]
    %115 = vset.pattern.permute.xlu0 3
    %116 = vperm.xlu0 %115, %v46
    %v117 = vpop.permute.xlu0 %116
    %v120 = vperm.slane %v114, 0
    %v121 = vperm.slane %v114, 1
    %v122 = vperm.slane %v114, 2
    %v126 = vmul.f32 %v117, %v120
    %v127 = vmul.f32 %v117, %v121
    %v128 = vmul.f32 %v117, %v122
    %v129 = vadd.f32 %v110, %v126
    %v130 = vadd.f32 %v111, %v127
    %v131 = vadd.f32 %v112, %v128
    %v132 = vxor.u32 %v129, 2147483648
    %v133 = vmul.f32 %v132, 1.442695
    %v134 = vpow.pop %v133
    %v135 = vadd.f32 %v134, 1.0
    %v136 = vrcp.pop %v135
    %v137 = vmul.f32 %v135, %v136
    %v138 = vsub.f32 1.0, %v137
    %v139 = vmul.f32 %v136, %v138
    %v140 = vadd.f32 %v136, %v139
    %vm141 = vweird.f32 %v135
    %vm142 = vweird.f32 %v136
    %vm143 = vmor %vm141, %vm142
    %v144 = vsel %vm143, %v136, %v140
    %v145 = vand.u32 2147483647, %v135
    %vm146 = vcmp.eq.f32.partialorder %v145, 8.507059e+37
    %v147 = vand.u32 %v135, 2147483648
    %v148 = vor.u32 1.1754944e-38, %v147
    %v149 = vsel %vm146, %v148, %v144
    %v150 = vmul.f32 1.0, %v149
    %v151 = vtanh.pop %v130
    %v152 = vxor.u32 %v131, 2147483648
    %v153 = vmul.f32 %v152, 1.442695
    %v154 = vpow.pop %v153
    %v155 = vadd.f32 %v154, 1.0
    %v156 = vrcp.pop %v155
    %v157 = vmul.f32 %v155, %v156
    %v158 = vsub.f32 1.0, %v157
    %v159 = vmul.f32 %v156, %v158
    %v160 = vadd.f32 %v156, %v159
    %vm161 = vweird.f32 %v155
    %vm162 = vweird.f32 %v156
    %vm163 = vmor %vm161, %vm162
    %v164 = vsel %vm163, %v156, %v160
    %v165 = vand.u32 2147483647, %v155
    %vm166 = vcmp.eq.f32.partialorder %v165, 8.507059e+37
    %v167 = vand.u32 %v155, 2147483648
    %v168 = vor.u32 1.1754944e-38, %v167
    %v169 = vsel %vm166, %v168, %v164
    %v170 = vmul.f32 1.0, %v169
    %v171 = vmul.f32 %v150, %v151
    %v172 = vtanh.pop %v171
    %v173 = vmul.f32 %v170, %v172
    %v174 = vld [vmem:[#allocation2 + $0x18] sm:$0xff]
    %v175 = vld [vmem:[#allocation2 + $0x20] sm:$0xff]
    %v176 = vld [vmem:[#allocation2 + $0x28] sm:$0xff]
    %v177 = vld [vmem:[#allocation2 + $0x30] sm:$0xff]
    %v178 = vld [vmem:[#allocation2 + $0x38] sm:$0xff]
    %v179 = vld [vmem:[#allocation2 + $0x40] sm:$0xff]
    %v180 = vld [vmem:[#allocation2 + $0x48] sm:$0xff]
    %v181 = vld [vmem:[#allocation2 + $0x50] sm:$0xff]
    %v182 = vld [vmem:[#allocation2 + $0x58] sm:$0xff]
    %v183 = vld [vmem:[#allocation2 + $0x60] sm:$0xff]
    %v184 = vld [vmem:[#allocation2 + $0x68] sm:$0xff]
    %v185 = vld [vmem:[#allocation2 + $0x70] sm:$0xff]
    %v186 = vld [vmem:[#allocation2 + $0x78] sm:$0xff]
    %v187 = vld [vmem:[#allocation2 + $0x80] sm:$0xff]
    %v188 = vld [vmem:[#allocation2 + $0x88] sm:$0xff]
    %v189 = vld [vmem:[#allocation2 + $0x90] sm:$0xff]
    %v190 = vld [vmem:[#allocation2 + $0x98] sm:$0xff]
    %v191 = vld [vmem:[#allocation2 + $0xa0] sm:$0xff]
    %v192 = vld [vmem:[#allocation2 + $0xa8] sm:$0xff]
    %v193 = vld [vmem:[#allocation2 + $0xb0] sm:$0xff]
    %v194 = vld [vmem:[#allocation2 + $0xb8] sm:$0xff]
    %v195 = vld [vmem:[#allocation2 + $0xc0] sm:$0xff]
    %v196 = vld [vmem:[#allocation2 + $0xc8] sm:$0xff]
    %v197 = vld [vmem:[#allocation2 + $0xd0] sm:$0xff]
    %v198 = vld [vmem:[#allocation2 + $0xd8] sm:$0xff]
    %v199 = vld [vmem:[#allocation2 + $0xe0] sm:$0xff]
    %v200 = vld [vmem:[#allocation2 + $0xe8] sm:$0xff]
    %v201 = vld [vmem:[#allocation2 + $0xf0] sm:$0xff]
    %v202 = vld [vmem:[#allocation2 + $0xf8] sm:$0xff]
    %v203 = vld [vmem:[#allocation2 + $0x100] sm:$0xff]
    %v204 = vld [vmem:[#allocation2 + $0x108] sm:$0xff]
    %v205 = vld [vmem:[#allocation2 + $0x110] sm:$0xff]
    %v206 = vld [vmem:[#allocation2 + $0x118] sm:$0xff]
    %v207 = vld [vmem:[#allocation2 + $0x120] sm:$0xff]
    %v208 = vld [vmem:[#allocation2 + $0x128] sm:$0xff]
    %v209 = vld [vmem:[#allocation2 + $0x130] sm:$0xff]
    %v210 = vld [vmem:[#allocation2 + $0x138] sm:$0xff]
    %v211 = vld [vmem:[#allocation2 + $0x140] sm:$0xff]
    %v212 = vld [vmem:[#allocation2 + $0x148] sm:$0xff]
    %v213 = vld [vmem:[#allocation2 + $0x150] sm:$0xff]
    %v214 = vld [vmem:[#allocation2 + $0x158] sm:$0xff]
    %v215 = vld [vmem:[#allocation2 + $0x160] sm:$0xff]
    %v216 = vld [vmem:[#allocation2 + $0x168] sm:$0xff]
    %v217 = vld [vmem:[#allocation2 + $0x170] sm:$0xff]
    %v218 = vld [vmem:[#allocation2 + $0x178] sm:$0xff]
    %v219 = vld [vmem:[#allocation2 + $0x180] sm:$0xff]
    %v220 = vld [vmem:[#allocation2 + $0x188] sm:$0xff]
    %v221 = vld [vmem:[#allocation2 + $0x190] sm:$0xff]
    %s222 = scalar_lea.vmem [#allocation2], 408
    %v223 = vld [vmem:[%s222] ss:$8 sm:$0x7]
    %v225 = vperm.slane %v223, 0
    %v226 = vperm.slane %v223, 1
    %v227 = vperm.slane %v223, 2
    %231 = vmatpush.msra.mxu0 %v219
    %232 = vmatpush.msra.mxu0 %v216
    %233 = vmatpush.msra.mxu0 %v213
    %234 = vmatpush.msra.mxu0 %v210
    %235 = vmatpush.msra.mxu0 %v207
    %236 = vmatpush.msra.mxu0 %v204
    %237 = vmatpush.msra.mxu0 %v201
    %238 = vmatpush.msra.mxu0 %v198
    %239 = vmatpush.msra.mxu0 %v195
    %240 = vmatpush.msra.mxu0 %v192
    %241 = vmatpush.msra.mxu0 %v189
    %242 = vmatpush.msra.mxu0 %v186
    %243 = vmatpush.msra.mxu0 %v183
    %244 = vmatpush.msra.mxu0 %v180
    %245 = vmatpush.msra.mxu0 %v177
    %246 = vmatpush.msra.mxu0 %v174
    %247 = vmatmul.f32.gmra.mxu0 %v173
    %v248 = vpop.f32.mrf.mxu0
    %v249 = vadd.f32 %v225, %v248
    %250 = vdwg.mxu0
    %251 = vmatpush.msra.mxu0 %v220
    %252 = vmatpush.msra.mxu0 %v217
    %253 = vmatpush.msra.mxu0 %v214
    %254 = vmatpush.msra.mxu0 %v211
    %255 = vmatpush.msra.mxu0 %v208
    %256 = vmatpush.msra.mxu0 %v205
    %257 = vmatpush.msra.mxu0 %v202
    %258 = vmatpush.msra.mxu0 %v199
    %259 = vmatpush.msra.mxu0 %v196
    %260 = vmatpush.msra.mxu0 %v193
    %261 = vmatpush.msra.mxu0 %v190
    %262 = vmatpush.msra.mxu0 %v187
    %263 = vmatpush.msra.mxu0 %v184
    %264 = vmatpush.msra.mxu0 %v181
    %265 = vmatpush.msra.mxu0 %v178
    %266 = vmatpush.msra.mxu0 %v175
    %267 = vmatmul.f32.gmra.mxu0 %v173
    %v268 = vpop.f32.mrf.mxu0
    %v269 = vadd.f32 %v226, %v268
    %270 = vdwg.mxu0
    %271 = vmatpush.msra.mxu0 %v221
    %272 = vmatpush.msra.mxu0 %v218
    %273 = vmatpush.msra.mxu0 %v215
    %274 = vmatpush.msra.mxu0 %v212
    %275 = vmatpush.msra.mxu0 %v209
    %276 = vmatpush.msra.mxu0 %v206
    %277 = vmatpush.msra.mxu0 %v203
    %278 = vmatpush.msra.mxu0 %v200
    %279 = vmatpush.msra.mxu0 %v197
    %280 = vmatpush.msra.mxu0 %v194
    %281 = vmatpush.msra.mxu0 %v191
    %282 = vmatpush.msra.mxu0 %v188
    %283 = vmatpush.msra.mxu0 %v185
    %284 = vmatpush.msra.mxu0 %v182
    %285 = vmatpush.msra.mxu0 %v179
    %286 = vmatpush.msra.mxu0 %v176
    %287 = vmatmul.f32.gmra.mxu0 %v173
    %v288 = vpop.f32.mrf.mxu0
    %v289 = vadd.f32 %v227, %v288
    %290 = vdwg.mxu0
    %v291 = vxor.u32 %v249, 2147483648
    %v292 = vmul.f32 %v291, 1.442695
    %v293 = vpow.pop %v292
    %v294 = vadd.f32 %v293, 1.0
    %v295 = vrcp.pop %v294
    %v296 = vmul.f32 %v294, %v295
    %v297 = vsub.f32 1.0, %v296
    %v298 = vmul.f32 %v295, %v297
    %v299 = vadd.f32 %v295, %v298
    %vm300 = vweird.f32 %v294
    %vm301 = vweird.f32 %v295
    %vm302 = vmor %vm300, %vm301
    %v303 = vsel %vm302, %v295, %v299
    %v304 = vand.u32 2147483647, %v294
    %vm305 = vcmp.eq.f32.partialorder %v304, 8.507059e+37
    %v306 = vand.u32 %v294, 2147483648
    %v307 = vor.u32 1.1754944e-38, %v306
    %v308 = vsel %vm305, %v307, %v303
    %v309 = vmul.f32 1.0, %v308
    %v310 = vtanh.pop %v269
    %v311 = vxor.u32 %v289, 2147483648
    %v312 = vmul.f32 %v311, 1.442695
    %v313 = vpow.pop %v312
    %v314 = vadd.f32 %v313, 1.0
    %v315 = vrcp.pop %v314
    %v316 = vmul.f32 %v314, %v315
    %v317 = vsub.f32 1.0, %v316
    %v318 = vmul.f32 %v315, %v317
    %v319 = vadd.f32 %v315, %v318
    %vm320 = vweird.f32 %v314
    %vm321 = vweird.f32 %v315
    %vm322 = vmor %vm320, %vm321
    %v323 = vsel %vm322, %v315, %v319
    %v324 = vand.u32 2147483647, %v314
    %vm325 = vcmp.eq.f32.partialorder %v324, 8.507059e+37
    %v326 = vand.u32 %v314, 2147483648
    %v327 = vor.u32 1.1754944e-38, %v326
    %v328 = vsel %vm325, %v327, %v323
    %v329 = vmul.f32 1.0, %v328
    %v330 = vmul.f32 %v309, %v310
    %v331 = vtanh.pop %v330
    %v332 = vmul.f32 %v329, %v331
    %v333 = vld [vmem:[#allocation4] sm:$0xff]
    %v334 = vld [vmem:[#allocation4 + $0x8] sm:$0xff]
    %v335 = vld [vmem:[#allocation4 + $0x10] sm:$0xff]
    %v336 = vld [vmem:[#allocation4 + $0x18] sm:$0xff]
    %v337 = vld [vmem:[#allocation4 + $0x20] sm:$0xff]
    %v338 = vld [vmem:[#allocation4 + $0x28] sm:$0xff]
    %v339 = vld [vmem:[#allocation4 + $0x30] sm:$0xff]
    %v340 = vld [vmem:[#allocation4 + $0x38] sm:$0xff]
    %v341 = vld [vmem:[#allocation4 + $0x40] sm:$0xff]
    %v342 = vld [vmem:[#allocation4 + $0x48] sm:$0xff]
    %v343 = vld [vmem:[#allocation4 + $0x50] sm:$0xff]
    %v344 = vld [vmem:[#allocation4 + $0x58] sm:$0xff]
    %v345 = vld [vmem:[#allocation4 + $0x60] sm:$0xff]
    %v346 = vld [vmem:[#allocation4 + $0x68] sm:$0xff]
    %v347 = vld [vmem:[#allocation4 + $0x70] sm:$0xff]
    %v348 = vld [vmem:[#allocation4 + $0x78] sm:$0xff]
    %v349 = vld [vmem:[#allocation4 + $0x80] sm:$0x1]
    %v350 = vperm.slane %v349, 0
    %351 = vmatpush.msra.mxu0 %v348
    %352 = vmatpush.msra.mxu0 %v347
    %353 = vmatpush.msra.mxu0 %v346
    %354 = vmatpush.msra.mxu0 %v345
    %355 = vmatpush.msra.mxu0 %v344
    %356 = vmatpush.msra.mxu0 %v343
    %357 = vmatpush.msra.mxu0 %v342
    %358 = vmatpush.msra.mxu0 %v341
    %359 = vmatpush.msra.mxu0 %v340
    %360 = vmatpush.msra.mxu0 %v339
    %361 = vmatpush.msra.mxu0 %v338
    %362 = vmatpush.msra.mxu0 %v337
    %363 = vmatpush.msra.mxu0 %v336
    %364 = vmatpush.msra.mxu0 %v335
    %365 = vmatpush.msra.mxu0 %v334
    %366 = vmatpush.msra.mxu0 %v333
    %367 = vmatmul.f32.gmra.mxu0 %v332
    %v368 = vpop.f32.mrf.mxu0
    %v369 = vadd.f32 %v350, %v368
    %370 = vdwg.mxu0
    %371 = vst [vmem:[%s3] sm:$0xff] %v369
    // Predicated region
    $region22: #{kamp_rnn_forward.1} parent=1 // pred_check
      _
    $region23: #{kamp_rnn_forward.1} parent=1 // pred_check_branch
      %373 = sbr.rel (0) target = $region25
    $region24: #{kamp_rnn_forward.1} parent=1 // pred_region
      _
    $region25: #{kamp_rnn_forward.1} parent=1 // pred_fallthru
      _
    // Predicated region
    $region26: #{kamp_rnn_forward.1} parent=1 // pred_check
      _
    $region27: #{kamp_rnn_forward.1} parent=1 // pred_check_branch
      %375 = sbr.rel (0) target = $region29
    $region28: #{kamp_rnn_forward.1} parent=1 // pred_region
      _
    $region29: #{kamp_rnn_forward.1} parent=1 // pred_fallthru
      _
    %376 = vsyncpa [#allocation3], 1
    %377 = vsyncpa [#allocation5], 1

</llo_original>
